<compile_context>
chip_gen: v6e
topology: v6e:2x2x1
jax: 0.10.0
libtpu: 0.0.40
codegen_flags: <defaults>
</compile_context>

<pallas_src>
import functools

import jax
import jax.numpy as jnp
from jax.experimental import pallas as pl
from jax.experimental.pallas import tpu as pltpu

LOG_STD_MIN = -20.0
LOG_STD_MAX = 2.0
LEAKY_SLOPE = 0.01          # PyTorch nn.LeakyReLU default negative_slope
HEAD_PAD = 128              # lane-dense fused head width (2 mu + 2 log_std + zeros)
OUT_W = 8                   # narrow HBM output width (cols 0:2 mu, 2:4 log_std)


def _leaky_relu(x):
    return jnp.where(x > 0, x, LEAKY_SLOPE * x)


def _round_up(x, m):
    return ((x + m - 1) // m) * m


def actor_kernel(x_ref, w1_ref, b1_ref, w2_ref, b2_ref, wh_ref, bh_ref, out_ref):
    """One batch tile. Weights are padded / fused and VMEM-resident."""
    mm_dt = w1_ref.dtype                       # matmul input dtype (bf16 or f32)
    x = x_ref[...].astype(mm_dt)

    # Layer 1: Linear(encode_size -> H2P) + LeakyReLU (padded cols stay 0)
    h1 = jnp.dot(x, w1_ref[...], preferred_element_type=jnp.float32) + b1_ref[...]
    h1 = _leaky_relu(h1)

    # Layer 2: Linear(H2P -> H2P) + LeakyReLU
    h2 = jnp.dot(h1.astype(mm_dt), w2_ref[...],
                 preferred_element_type=jnp.float32) + b2_ref[...]
    h2 = _leaky_relu(h2)

    # Fused head (full 128-lane MXU pass): cols [0:2] = mu, [2:4] = log_std.
    head = jnp.dot(h2.astype(mm_dt), wh_ref[...],
                   preferred_element_type=jnp.float32) + bh_ref[...]

    # Only the 8 real output lanes go back to HBM (16x less writeback).
    out_ref[...] = head[:, :OUT_W].astype(out_ref.dtype)


@functools.partial(jax.jit, static_argnames=("tile_batch", "matmul_dtype"))
def actor_forward(encode, params, *, tile_batch=None, matmul_dtype=jnp.bfloat16):
    """encode: (B, encode_size) float32. Returns (mu, log_std), each (B, 2)."""
    w1, b1, w2, b2, wmu, bmu, wls, bls = params
    B, K = encode.shape
    H2 = w1.shape[1]
    H2P = _round_up(H2, 128)                   # lane-dense hidden width

    # ---- Weight preparation (tiny, done once under jit) --------------------
    def pad2(a, rows, cols):
        return jnp.pad(a, ((0, rows - a.shape[0]), (0, cols - a.shape[1])))

    dt = matmul_dtype
    w1p = pad2(w1, K, H2P).astype(dt)                 # (K, H2P)
    b1p = pad2(b1, 1, H2P).astype(jnp.float32)        # (1, H2P)
    w2p = pad2(w2, H2P, H2P).astype(dt)               # (H2P, H2P)
    b2p = pad2(b2, 1, H2P).astype(jnp.float32)        # (1, H2P)

    # Fused head: columns 0:2 = Wmu, 2:4 = Wls, the rest zero.
    whead = jnp.zeros((H2P, HEAD_PAD), jnp.float32)
    whead = whead.at[:H2, 0:2].set(wmu).at[:H2, 2:4].set(wls).astype(dt)
    bhead = jnp.zeros((1, HEAD_PAD), jnp.float32)
    bhead = bhead.at[:, 0:2].set(bmu).at[:, 2:4].set(bls)

    # ---- Batch tiling -------------------------------------------------------
    if tile_batch is None:
        if B <= 2048:
            tile_batch = _round_up(B, 8)               # single tile at small B
        elif B <= 8192:
            tile_batch = _round_up((B + 1) // 2, 256)  # >=2 steps (feeds v7x's 2 TCs)
        else:
            tile_batch = 4096                          # cap for v7x 64 MiB VMEM
    TB = tile_batch
    B_pad = _round_up(B, TB)
    x = encode if B_pad == B else jnp.pad(encode, ((0, B_pad - B), (0, 0)))

    grid = (B_pad // TB,)
    resident = lambda a: pl.BlockSpec(a.shape, lambda i: (0,) * a.ndim)

    out = pl.pallas_call(
        actor_kernel,
        out_shape=jax.ShapeDtypeStruct((B_pad, OUT_W), jnp.float32),
        grid=grid,
        in_specs=[
            pl.BlockSpec((TB, K), lambda i: (i, 0)),      # activations: tiled
            resident(w1p), resident(b1p),                  # weights: VMEM-resident
            resident(w2p), resident(b2p),
            resident(whead), resident(bhead),
        ],
        out_specs=pl.BlockSpec((TB, OUT_W), lambda i: (i, 0)),
        compiler_params=pltpu.CompilerParams(
            dimension_semantics=("parallel",),
            vmem_limit_bytes=32 * 1024 * 1024,
        ),
    )(x, w1p, b1p, w2p, b2p, whead, bhead)

    mu = out[:B, 0:2]
    # Clamp done on the tiny (B, 2) slice in the wrapper (cheaper than a full
    # (TB, 128) masked-where inside the kernel).
    log_std = jnp.clip(out[:B, 2:4], LOG_STD_MIN, LOG_STD_MAX)
    return mu, log_std


def init_params(key, encode_size, hidden_size):
    """Deterministic synthetic init (module's init_weights is opaque)."""
    # TODO(synk): replicate the exact `init_weights` initializer if its
    # definition becomes available; forward math is initializer-agnostic.
    h2 = hidden_size * 2
    ks = jax.random.split(key, 8)
    scale = 0.1
    w1 = scale * jax.random.normal(ks[0], (encode_size, h2), jnp.float32)
    b1 = scale * jax.random.normal(ks[1], (1, h2), jnp.float32)
    w2 = scale * jax.random.normal(ks[2], (h2, h2), jnp.float32)
    b2 = scale * jax.random.normal(ks[3], (1, h2), jnp.float32)
    wmu = scale * jax.random.normal(ks[4], (h2, 2), jnp.float32)
    bmu = scale * jax.random.normal(ks[5], (1, 2), jnp.float32)
    wls = scale * jax.random.normal(ks[6], (h2, 2), jnp.float32)
    bls = scale * jax.random.normal(ks[7], (1, 2), jnp.float32)
    return (w1, b1, w2, b2, wmu, bmu, wls, bls)


def actor_forward_ref(encode, params):
    """Plain-JAX reference for correctness check."""
    w1, b1, w2, b2, wmu, bmu, wls, bls = params
    h1 = _leaky_relu(encode @ w1 + b1)
    h2 = _leaky_relu(h1 @ w2 + b2)
    mu = h2 @ wmu + bmu
    ls = jnp.clip(h2 @ wls + bls, LOG_STD_MIN, LOG_STD_MAX)
    return mu, ls


if __name__ == "__main__":
    key = jax.random.PRNGKey(0)
    k_param, k_x = jax.random.split(key)

    batch = 8
    encode_size = 32
    hidden_size = 32  # -> hidden*2 = 64 (padded to 128 inside the wrapper)

    params = init_params(k_param, encode_size, hidden_size)
    encode = jax.random.normal(k_x, (batch, encode_size), jnp.float32)

    mu_ref, ls_ref = actor_forward_ref(encode, params)

    # Default bf16 matmul path (f32 accumulation) — recommended on all gens.
    mu, log_std = actor_forward(encode, params)
    mu = jax.block_until_ready(mu)
    log_std = jax.block_until_ready(log_std)
    assert mu.shape == (batch, 2) and log_std.shape == (batch, 2)
    assert jnp.allclose(mu, mu_ref, atol=3e-2, rtol=3e-2)
    assert jnp.allclose(log_std, ls_ref, atol=3e-2, rtol=3e-2)

    # f32 matmul path — tight tolerance correctness check.
    mu32, ls32 = actor_forward(encode, params, matmul_dtype=jnp.float32)
    mu32 = jax.block_until_ready(mu32)
    ls32 = jax.block_until_ready(ls32)
    assert jnp.allclose(mu32, mu_ref, atol=1e-5, rtol=1e-5)
    assert jnp.allclose(ls32, ls_ref, atol=1e-5, rtol=1e-5)

    print("KERNEL_OK")
</pallas_src>

<mosaic_0001>
module attributes {stable_mosaic.version = 11 : i64} {
  func.func @actor_kernel(%arg0: i32, %arg1: memref<8x32xf32, #tpu.memory_space<vmem>>, %arg2: memref<32x128xbf16, #tpu.memory_space<vmem>>, %arg3: memref<1x128xf32, #tpu.memory_space<vmem>>, %arg4: memref<128x128xbf16, #tpu.memory_space<vmem>>, %arg5: memref<1x128xf32, #tpu.memory_space<vmem>>, %arg6: memref<128x128xbf16, #tpu.memory_space<vmem>>, %arg7: memref<1x128xf32, #tpu.memory_space<vmem>>, %arg8: memref<8x8xf32, #tpu.memory_space<vmem>>) attributes {dimension_semantics = [#tpu.dimension_semantics<parallel>], iteration_bounds = array<i64: 1>, scalar_prefetch = 0 : i64, scratch_operands = 0 : i64, tpu.core_type = #tpu.core_type<tc>, window_params = [{transform_indices = @transform_0, window_bounds = array<i64: 8, 32>}, {pipeline_mode = #tpu.pipeline_mode<synchronous>, transform_indices = @transform_1, window_bounds = array<i64: 32, 128>}, {pipeline_mode = #tpu.pipeline_mode<synchronous>, transform_indices = @transform_2, window_bounds = array<i64: 1, 128>}, {pipeline_mode = #tpu.pipeline_mode<synchronous>, transform_indices = @transform_3, window_bounds = array<i64: 128, 128>}, {pipeline_mode = #tpu.pipeline_mode<synchronous>, transform_indices = @transform_4, window_bounds = array<i64: 1, 128>}, {pipeline_mode = #tpu.pipeline_mode<synchronous>, transform_indices = @transform_5, window_bounds = array<i64: 128, 128>}, {pipeline_mode = #tpu.pipeline_mode<synchronous>, transform_indices = @transform_6, window_bounds = array<i64: 1, 128>}, {transform_indices = @transform_7, window_bounds = array<i64: 8, 8>}]} {
    %c0 = arith.constant 0 : index
    %c0_0 = arith.constant 0 : index
    %0 = vector.load %arg1[%c0, %c0_0] : memref<8x32xf32, #tpu.memory_space<vmem>>, vector<8x32xf32>
    %1 = arith.truncf %0 : vector<8x32xf32> to vector<8x32xbf16>
    %c0_1 = arith.constant 0 : index
    %c0_2 = arith.constant 0 : index
    %2 = vector.load %arg2[%c0_1, %c0_2] : memref<32x128xbf16, #tpu.memory_space<vmem>>, vector<32x128xbf16>
    %cst = arith.constant dense<0.000000e+00> : vector<8x128xf32>
    %3 = tpu.matmul %1, %2, %cst {dimension_numbers = #tpu.dot_dimension_numbers<[1], [0], [0], [1], [0, 0, 1, 1], [], []>} : vector<8x32xbf16>, vector<32x128xbf16>, vector<8x128xf32> -> vector<8x128xf32>
    %c0_3 = arith.constant 0 : index
    %c0_4 = arith.constant 0 : index
    %4 = vector.load %arg3[%c0_3, %c0_4] : memref<1x128xf32, #tpu.memory_space<vmem>>, vector<1x128xf32>
    %5 = vector.broadcast %4 : vector<1x128xf32> to vector<8x128xf32>
    %6 = arith.addf %3, %5 : vector<8x128xf32>
    %cst_5 = arith.constant 0.000000e+00 : f32
    %7 = vector.broadcast %cst_5 : f32 to vector<8x128xf32>
    %8 = arith.cmpf ogt, %6, %7 : vector<8x128xf32>
    %cst_6 = arith.constant 0.00999999977 : f32
    %9 = vector.broadcast %cst_6 : f32 to vector<8x128xf32>
    %10 = arith.mulf %9, %6 : vector<8x128xf32>
    %11 = arith.select %8, %6, %10 : vector<8x128xi1>, vector<8x128xf32>
    %12 = arith.truncf %11 : vector<8x128xf32> to vector<8x128xbf16>
    %c0_7 = arith.constant 0 : index
    %c0_8 = arith.constant 0 : index
    %13 = vector.load %arg4[%c0_7, %c0_8] : memref<128x128xbf16, #tpu.memory_space<vmem>>, vector<128x128xbf16>
    %cst_9 = arith.constant dense<0.000000e+00> : vector<8x128xf32>
    %14 = tpu.matmul %12, %13, %cst_9 {dimension_numbers = #tpu.dot_dimension_numbers<[1], [0], [0], [1], [0, 0, 1, 1], [], []>} : vector<8x128xbf16>, vector<128x128xbf16>, vector<8x128xf32> -> vector<8x128xf32>
    %c0_10 = arith.constant 0 : index
    %c0_11 = arith.constant 0 : index
    %15 = vector.load %arg5[%c0_10, %c0_11] : memref<1x128xf32, #tpu.memory_space<vmem>>, vector<1x128xf32>
    %16 = vector.broadcast %15 : vector<1x128xf32> to vector<8x128xf32>
    %17 = arith.addf %14, %16 : vector<8x128xf32>
    %cst_12 = arith.constant 0.000000e+00 : f32
    %18 = vector.broadcast %cst_12 : f32 to vector<8x128xf32>
    %19 = arith.cmpf ogt, %17, %18 : vector<8x128xf32>
    %cst_13 = arith.constant 0.00999999977 : f32
    %20 = vector.broadcast %cst_13 : f32 to vector<8x128xf32>
    %21 = arith.mulf %20, %17 : vector<8x128xf32>
    %22 = arith.select %19, %17, %21 : vector<8x128xi1>, vector<8x128xf32>
    %23 = arith.truncf %22 : vector<8x128xf32> to vector<8x128xbf16>
    %c0_14 = arith.constant 0 : index
    %c0_15 = arith.constant 0 : index
    %24 = vector.load %arg6[%c0_14, %c0_15] : memref<128x128xbf16, #tpu.memory_space<vmem>>, vector<128x128xbf16>
    %cst_16 = arith.constant dense<0.000000e+00> : vector<8x128xf32>
    %25 = tpu.matmul %23, %24, %cst_16 {dimension_numbers = #tpu.dot_dimension_numbers<[1], [0], [0], [1], [0, 0, 1, 1], [], []>} : vector<8x128xbf16>, vector<128x128xbf16>, vector<8x128xf32> -> vector<8x128xf32>
    %c0_17 = arith.constant 0 : index
    %c0_18 = arith.constant 0 : index
    %26 = vector.load %arg7[%c0_17, %c0_18] : memref<1x128xf32, #tpu.memory_space<vmem>>, vector<1x128xf32>
    %27 = vector.broadcast %26 : vector<1x128xf32> to vector<8x128xf32>
    %28 = arith.addf %25, %27 : vector<8x128xf32>
    %29 = vector.extract_strided_slice %28 {offsets = [0, 0], sizes = [8, 8], strides = [1, 1]} : vector<8x128xf32> to vector<8x8xf32>
    %c0_19 = arith.constant 0 : index
    %c0_20 = arith.constant 0 : index
    %30 = vector.load %arg8[%c0_19, %c0_20] : memref<8x8xf32, #tpu.memory_space<vmem>>, vector<8x8xf32>
    tpu.vector_store %arg8[%c0_19, %c0_20], %29 {strides = array<i32>} : memref<8x8xf32, #tpu.memory_space<vmem>>, vector<8x8xf32>,
    return
  }
  func.func @transform_0(%arg0: i32) -> (i32, i32) {
    %c0_i32 = arith.constant 0 : i32
    %c0_i32_0 = arith.constant 0 : i32
    return %arg0, %c0_i32 : i32, i32
  }
  func.func @transform_1(%arg0: i32) -> (i32, i32) {
    %c0_i32 = arith.constant 0 : i32
    %c0_i32_0 = arith.constant 0 : i32
    %c0_i32_1 = arith.constant 0 : i32
    return %c0_i32, %c0_i32_0 : i32, i32
  }
  func.func @transform_2(%arg0: i32) -> (i32, i32) {
    %c0_i32 = arith.constant 0 : i32
    %c0_i32_0 = arith.constant 0 : i32
    %c0_i32_1 = arith.constant 0 : i32
    return %c0_i32, %c0_i32_0 : i32, i32
  }
  func.func @transform_3(%arg0: i32) -> (i32, i32) {
    %c0_i32 = arith.constant 0 : i32
    %c0_i32_0 = arith.constant 0 : i32
    %c0_i32_1 = arith.constant 0 : i32
    return %c0_i32, %c0_i32_0 : i32, i32
  }
  func.func @transform_4(%arg0: i32) -> (i32, i32) {
    %c0_i32 = arith.constant 0 : i32
    %c0_i32_0 = arith.constant 0 : i32
    %c0_i32_1 = arith.constant 0 : i32
    return %c0_i32, %c0_i32_0 : i32, i32
  }
  func.func @transform_5(%arg0: i32) -> (i32, i32) {
    %c0_i32 = arith.constant 0 : i32
    %c0_i32_0 = arith.constant 0 : i32
    %c0_i32_1 = arith.constant 0 : i32
    return %c0_i32, %c0_i32_0 : i32, i32
  }
  func.func @transform_6(%arg0: i32) -> (i32, i32) {
    %c0_i32 = arith.constant 0 : i32
    %c0_i32_0 = arith.constant 0 : i32
    %c0_i32_1 = arith.constant 0 : i32
    return %c0_i32, %c0_i32_0 : i32, i32
  }
  func.func @transform_7(%arg0: i32) -> (i32, i32) {
    %c0_i32 = arith.constant 0 : i32
    %c0_i32_0 = arith.constant 0 : i32
    return %arg0, %c0_i32 : i32, i32
  }
}

</mosaic_0001>

<llo_original>
// kernel: actor_forward.1
$region0: #{actor_forward.1}
  #allocation0 [shape = 'u32[]', space=smem, size = 0x4, offset = 0x4, fixed_abs, tag = 'smem constant byte address 0x4 - core index']
  #allocation1 [shape = 'u32[144,128]{1,0:T(1,128)}', space=vmem, size = 0x12000, scoped, tag = 'internal scratch']
  %s0 = inlined_call_operand.vmem [shape: f32[8,32], index: 0, kind: input, shape index: {}]
  %s1 = inlined_call_operand.vmem [shape: bf16[32,128], index: 1, kind: input, shape index: {}]
  %s2 = inlined_call_operand.vmem [shape: f32[1,128], index: 2, kind: input, shape index: {}]
  %s3 = inlined_call_operand.vmem [shape: bf16[128,128], index: 3, kind: input, shape index: {}]
  %s4 = inlined_call_operand.vmem [shape: f32[1,128], index: 4, kind: input, shape index: {}]
  %s5 = inlined_call_operand.vmem [shape: bf16[128,128], index: 5, kind: input, shape index: {}]
  %s6 = inlined_call_operand.vmem [shape: f32[1,128], index: 6, kind: input, shape index: {}]
  %s7 = inlined_call_operand.vmem [shape: f32[8,8], index: 7, kind: output, shape index: {}]
  %s8 = sld [smem:[#allocation0]]
  $region38: #{actor_forward.1} parent=0
    _
  %s10 = ssub.s32 1, %s8
  %s11 = scalar_select 0, %s10, %s8
  // Predicated region
  $region2: #{actor_forward.1} parent=0 // pred_check
    _
  $region3: #{actor_forward.1} parent=0 // pred_check_branch
    %13 = sbr.rel (0) target = $region5
  $region4: #{actor_forward.1} parent=0 // pred_region
    _
  $region5: #{actor_forward.1} parent=0 // pred_fallthru
    _
  // Predicated region
  $region6: #{actor_forward.1} parent=0 // pred_check
    _
  $region7: #{actor_forward.1} parent=0 // pred_check_branch
    %15 = sbr.rel (0) target = $region9
  $region8: #{actor_forward.1} parent=0 // pred_region
    _
  $region9: #{actor_forward.1} parent=0 // pred_fallthru
    _
  // Predicated region
  $region10: #{actor_forward.1} parent=0 // pred_check
    _
  $region11: #{actor_forward.1} parent=0 // pred_check_branch
    %17 = sbr.rel (0) target = $region13
  $region12: #{actor_forward.1} parent=0 // pred_region
    _
  $region13: #{actor_forward.1} parent=0 // pred_fallthru
    _
  // Predicated region
  $region14: #{actor_forward.1} parent=0 // pred_check
    _
  $region15: #{actor_forward.1} parent=0 // pred_check_branch
    %19 = sbr.rel (0) target = $region17
  $region16: #{actor_forward.1} parent=0 // pred_region
    _
  $region17: #{actor_forward.1} parent=0 // pred_fallthru
    _
  // Predicated region
  $region18: #{actor_forward.1} parent=0 // pred_check
    _
  $region19: #{actor_forward.1} parent=0 // pred_check_branch
    %21 = sbr.rel (0) target = $region21
  $region20: #{actor_forward.1} parent=0 // pred_region
    _
  $region21: #{actor_forward.1} parent=0 // pred_fallthru
    _
  // Predicated region
  $region22: #{actor_forward.1} parent=0 // pred_check
    _
  $region23: #{actor_forward.1} parent=0 // pred_check_branch
    %23 = sbr.rel (0) target = $region25
  $region24: #{actor_forward.1} parent=0 // pred_region
    _
  $region25: #{actor_forward.1} parent=0 // pred_fallthru
    _
  // Predicated region
  $region26: #{actor_forward.1} parent=0 // pred_check
    _
  $region27: #{actor_forward.1} parent=0 // pred_check_branch
    %25 = sbr.rel (0) target = $region29
  $region28: #{actor_forward.1} parent=0 // pred_region
    _
  $region29: #{actor_forward.1} parent=0 // pred_fallthru
    _
  %v27 = vld [vmem:[%s0] sm:$0xff]
  %v28 = vpack.c.bf16 %v27, %v27
  %v29 = vld [vmem:[%s1] sm:$0xf]
  %v30 = vld [vmem:[%s1 + $0x4] sm:$0xf]
  %v31 = vld [vmem:[%s1 + $0x8] sm:$0xf]
  %v32 = vld [vmem:[%s1 + $0xc] sm:$0xf]
  %v33 = vld [vmem:[%s2] sm:$0x1]
  %v35 = vlaneseq
  %v36 = vshrl.u32 %v35, 7
  %v37 = vsub.s32 0, %v36
  %v38 = vrot.slane %v33, %v37
  %v44 = vunpack.c.l.b16 %v29
  %v45 = vunpack.c.l.b16 %v30
  %v46 = vunpack.c.l.b16 %v31
  %v47 = vunpack.c.l.b16 %v32
  %v48 = vpack.c.b16 %v45, %v44
  %v49 = vpack.c.b16 %v47, %v46
  %vm52 = vcmask 261120
  %v54 = vsel %vm52, %v28, 0
  %56 = vmatprep.subr.bf16.mxu0 0
  %57 = vmatpush1.bf16.msra.mxu0 0
  %58 = vmatprep.subr.bf16.mxu0 0
  %59 = vmatpush1.bf16.msra.mxu0 0
  %60 = vmatprep.subr.bf16.mxu0 0
  %61 = vmatpush1.bf16.msra.mxu0 0
  %62 = vmatprep.subr.bf16.mxu0 0
  %63 = vmatpush1.bf16.msra.mxu0 0
  %64 = vmatprep.subr.bf16.mxu0 0
  %65 = vmatpush1.bf16.msra.mxu0 0
  %66 = vmatprep.subr.bf16.mxu0 0
  %67 = vmatpush1.bf16.msra.mxu0 0
  %68 = vmatprep.subr.bf16.mxu0 0
  %69 = vmatpush1.bf16.msra.mxu0 %v49
  %70 = vmatprep.subr.bf16.mxu0 0
  %71 = vmatpush1.bf16.msra.mxu0 %v48
  %72 = vmatprep.subr.bf16.mxu0 0
  %73 = vmatpush2.bf16.msra.mxu0 0
  %74 = vmatprep.subr.bf16.mxu0 0
  %75 = vmatpush2.bf16.msra.mxu0 0
  %76 = vmatprep.subr.bf16.mxu0 0
  %77 = vmatpush2.bf16.msra.mxu0 0
  %78 = vmatprep.subr.bf16.mxu0 0
  %79 = vmatpush2.bf16.msra.mxu0 0
  %80 = vmatprep.subr.bf16.mxu0 0
  %81 = vmatpush2.bf16.msra.mxu0 0
  %82 = vmatprep.subr.bf16.mxu0 0
  %83 = vmatpush2.bf16.msra.mxu0 0
  %84 = vmatprep.subr.bf16.mxu0 0
  %85 = vmatpush2.bf16.msra.mxu0 0
  %86 = vmatprep.subr.bf16.mxu0 0
  %87 = vmatpush2.bf16.msra.mxu0 0
  %88 = vmatprep.mubr.bf16.mxu0 0
  %89 = vmatmul.mubr.bf16.gmra.mxu0 %v54
  %v90 = vpop.f32.mrf.mxu0
  %v91 = vadd.f32 %v38, %v90
  %v92 = vpop.f32.mrf.mxu0
  %v93 = vpop.f32.mrf.mxu0
  %v94 = vpop.f32.mrf.mxu0
  %95 = vdwg.mxu0
  %vm96 = vcmp.gt.f32.partialorder %v91, 0.0
  %v97 = vmul.f32 %v91, 0.01
  %v98 = vsel %vm96, %v91, %v97
  %v99 = vpack.c.bf16 %v98, %v98
  %v100 = vld [vmem:[%s3] sm:$0xf]
  %v101 = vld [vmem:[%s3 + $0x4] sm:$0xf]
  %v102 = vld [vmem:[%s3 + $0x8] sm:$0xf]
  %v103 = vld [vmem:[%s3 + $0xc] sm:$0xf]
  %v104 = vld [vmem:[%s3 + $0x10] sm:$0xf]
  %v105 = vld [vmem:[%s3 + $0x14] sm:$0xf]
  %v106 = vld [vmem:[%s3 + $0x18] sm:$0xf]
  %v107 = vld [vmem:[%s3 + $0x1c] sm:$0xf]
  %v108 = vld [vmem:[%s3 + $0x20] sm:$0xf]
  %v109 = vld [vmem:[%s3 + $0x24] sm:$0xf]
  %v110 = vld [vmem:[%s3 + $0x28] sm:$0xf]
  %v111 = vld [vmem:[%s3 + $0x2c] sm:$0xf]
  %v112 = vld [vmem:[%s3 + $0x30] sm:$0xf]
  %v113 = vld [vmem:[%s3 + $0x34] sm:$0xf]
  %v114 = vld [vmem:[%s3 + $0x38] sm:$0xf]
  %v115 = vld [vmem:[%s3 + $0x3c] sm:$0xf]
  %v116 = vld [vmem:[%s4] sm:$0x1]
  %v118 = vlaneseq
  %v119 = vshrl.u32 %v118, 7
  %v120 = vsub.s32 0, %v119
  %v121 = vrot.slane %v116, %v120
  %v139 = vunpack.c.l.b16 %v100
  %v140 = vunpack.c.l.b16 %v101
  %v141 = vunpack.c.l.b16 %v102
  %v142 = vunpack.c.l.b16 %v103
  %v143 = vunpack.c.l.b16 %v104
  %v144 = vunpack.c.l.b16 %v105
  %v145 = vunpack.c.l.b16 %v106
  %v146 = vunpack.c.l.b16 %v107
  %v147 = vunpack.c.l.b16 %v108
  %v148 = vunpack.c.l.b16 %v109
  %v149 = vunpack.c.l.b16 %v110
  %v150 = vunpack.c.l.b16 %v111
  %v151 = vunpack.c.l.b16 %v112
  %v152 = vunpack.c.l.b16 %v113
  %v153 = vunpack.c.l.b16 %v114
  %v154 = vunpack.c.l.b16 %v115
  %v155 = vpack.c.b16 %v140, %v139
  %v156 = vpack.c.b16 %v142, %v141
  %v157 = vpack.c.b16 %v144, %v143
  %v158 = vpack.c.b16 %v146, %v145
  %v159 = vpack.c.b16 %v148, %v147
  %v160 = vpack.c.b16 %v150, %v149
  %v161 = vpack.c.b16 %v152, %v151
  %v162 = vpack.c.b16 %v154, %v153
  %171 = vmatprep.subr.bf16.mxu0 0
  %172 = vmatpush1.bf16.msra.mxu0 %v162
  %173 = vmatprep.subr.bf16.mxu0 0
  %174 = vmatpush1.bf16.msra.mxu0 %v161
  %175 = vmatprep.subr.bf16.mxu0 0
  %176 = vmatpush1.bf16.msra.mxu0 %v160
  %177 = vmatprep.subr.bf16.mxu0 0
  %178 = vmatpush1.bf16.msra.mxu0 %v159
  %179 = vmatprep.subr.bf16.mxu0 0
  %180 = vmatpush1.bf16.msra.mxu0 %v158
  %181 = vmatprep.subr.bf16.mxu0 0
  %182 = vmatpush1.bf16.msra.mxu0 %v157
  %183 = vmatprep.subr.bf16.mxu0 0
  %184 = vmatpush1.bf16.msra.mxu0 %v156
  %185 = vmatprep.subr.bf16.mxu0 0
  %186 = vmatpush1.bf16.msra.mxu0 %v155
  %187 = vmatprep.subr.bf16.mxu0 0
  %188 = vmatpush2.bf16.msra.mxu0 0
  %189 = vmatprep.subr.bf16.mxu0 0
  %190 = vmatpush2.bf16.msra.mxu0 0
  %191 = vmatprep.subr.bf16.mxu0 0
  %192 = vmatpush2.bf16.msra.mxu0 0
  %193 = vmatprep.subr.bf16.mxu0 0
  %194 = vmatpush2.bf16.msra.mxu0 0
  %195 = vmatprep.subr.bf16.mxu0 0
  %196 = vmatpush2.bf16.msra.mxu0 0
  %197 = vmatprep.subr.bf16.mxu0 0
  %198 = vmatpush2.bf16.msra.mxu0 0
  %199 = vmatprep.subr.bf16.mxu0 0
  %200 = vmatpush2.bf16.msra.mxu0 0
  %201 = vmatprep.subr.bf16.mxu0 0
  %202 = vmatpush2.bf16.msra.mxu0 0
  %203 = vmatprep.mubr.bf16.mxu0 0
  %204 = vmatmul.mubr.bf16.gmra.mxu0 %v99
  %v205 = vpop.f32.mrf.mxu0
  %v206 = vadd.f32 %v121, %v205
  %v207 = vpop.f32.mrf.mxu0
  %v208 = vpop.f32.mrf.mxu0
  %v209 = vpop.f32.mrf.mxu0
  %210 = vdwg.mxu0
  %vm211 = vcmp.gt.f32.partialorder %v206, 0.0
  %v212 = vmul.f32 %v206, 0.01
  %v213 = vsel %vm211, %v206, %v212
  %v214 = vpack.c.bf16 %v213, %v213
  %v215 = vld [vmem:[%s5] sm:$0xf]
  %v216 = vld [vmem:[%s5 + $0x4] sm:$0xf]
  %v217 = vld [vmem:[%s5 + $0x8] sm:$0xf]
  %v218 = vld [vmem:[%s5 + $0xc] sm:$0xf]
  %v219 = vld [vmem:[%s5 + $0x10] sm:$0xf]
  %v220 = vld [vmem:[%s5 + $0x14] sm:$0xf]
  %v221 = vld [vmem:[%s5 + $0x18] sm:$0xf]
  %v222 = vld [vmem:[%s5 + $0x1c] sm:$0xf]
  %v223 = vld [vmem:[%s5 + $0x20] sm:$0xf]
  %v224 = vld [vmem:[%s5 + $0x24] sm:$0xf]
  %v225 = vld [vmem:[%s5 + $0x28] sm:$0xf]
  %v226 = vld [vmem:[%s5 + $0x2c] sm:$0xf]
  %v227 = vld [vmem:[%s5 + $0x30] sm:$0xf]
  %v228 = vld [vmem:[%s5 + $0x34] sm:$0xf]
  %v229 = vld [vmem:[%s5 + $0x38] sm:$0xf]
  %v230 = vld [vmem:[%s5 + $0x3c] sm:$0xf]
  %v231 = vld [vmem:[%s6] sm:$0x1]
  %v233 = vlaneseq
  %v234 = vshrl.u32 %v233, 7
  %v235 = vsub.s32 0, %v234
  %v236 = vrot.slane %v231, %v235
  %v254 = vunpack.c.l.b16 %v215
  %v255 = vunpack.c.l.b16 %v216
  %v256 = vunpack.c.l.b16 %v217
  %v257 = vunpack.c.l.b16 %v218
  %v258 = vunpack.c.l.b16 %v219
  %v259 = vunpack.c.l.b16 %v220
  %v260 = vunpack.c.l.b16 %v221
  %v261 = vunpack.c.l.b16 %v222
  %v262 = vunpack.c.l.b16 %v223
  %v263 = vunpack.c.l.b16 %v224
  %v264 = vunpack.c.l.b16 %v225
  %v265 = vunpack.c.l.b16 %v226
  %v266 = vunpack.c.l.b16 %v227
  %v267 = vunpack.c.l.b16 %v228
  %v268 = vunpack.c.l.b16 %v229
  %v269 = vunpack.c.l.b16 %v230
  %v270 = vpack.c.b16 %v255, %v254
  %v271 = vpack.c.b16 %v257, %v256
  %v272 = vpack.c.b16 %v259, %v258
  %v273 = vpack.c.b16 %v261, %v260
  %v274 = vpack.c.b16 %v263, %v262
  %v275 = vpack.c.b16 %v265, %v264
  %v276 = vpack.c.b16 %v267, %v266
  %v277 = vpack.c.b16 %v269, %v268
  %286 = vmatprep.subr.bf16.mxu0 0
  %287 = vmatpush1.bf16.msra.mxu0 %v277
  %288 = vmatprep.subr.bf16.mxu0 0
  %289 = vmatpush1.bf16.msra.mxu0 %v276
  %290 = vmatprep.subr.bf16.mxu0 0
  %291 = vmatpush1.bf16.msra.mxu0 %v275
  %292 = vmatprep.subr.bf16.mxu0 0
  %293 = vmatpush1.bf16.msra.mxu0 %v274
  %294 = vmatprep.subr.bf16.mxu0 0
  %295 = vmatpush1.bf16.msra.mxu0 %v273
  %296 = vmatprep.subr.bf16.mxu0 0
  %297 = vmatpush1.bf16.msra.mxu0 %v272
  %298 = vmatprep.subr.bf16.mxu0 0
  %299 = vmatpush1.bf16.msra.mxu0 %v271
  %300 = vmatprep.subr.bf16.mxu0 0
  %301 = vmatpush1.bf16.msra.mxu0 %v270
  %302 = vmatprep.subr.bf16.mxu0 0
  %303 = vmatpush2.bf16.msra.mxu0 0
  %304 = vmatprep.subr.bf16.mxu0 0
  %305 = vmatpush2.bf16.msra.mxu0 0
  %306 = vmatprep.subr.bf16.mxu0 0
  %307 = vmatpush2.bf16.msra.mxu0 0
  %308 = vmatprep.subr.bf16.mxu0 0
  %309 = vmatpush2.bf16.msra.mxu0 0
  %310 = vmatprep.subr.bf16.mxu0 0
  %311 = vmatpush2.bf16.msra.mxu0 0
  %312 = vmatprep.subr.bf16.mxu0 0
  %313 = vmatpush2.bf16.msra.mxu0 0
  %314 = vmatprep.subr.bf16.mxu0 0
  %315 = vmatpush2.bf16.msra.mxu0 0
  %316 = vmatprep.subr.bf16.mxu0 0
  %317 = vmatpush2.bf16.msra.mxu0 0
  %318 = vmatprep.mubr.bf16.mxu0 0
  %319 = vmatmul.mubr.bf16.gmra.mxu0 %v214
  %v320 = vpop.f32.mrf.mxu0
  %v321 = vadd.f32 %v236, %v320
  %v322 = vpop.f32.mrf.mxu0
  %v323 = vpop.f32.mrf.mxu0
  %v324 = vpop.f32.mrf.mxu0
  %325 = vdwg.mxu0
  %vm326 = vcmask 64512
  %327 = vst.msk [vmem:[%s7] sm:$0xff] %vm326, %v321
  // Predicated region
  $region30: #{actor_forward.1} parent=0 // pred_check
    _
  $region31: #{actor_forward.1} parent=0 // pred_check_branch
    %329 = sbr.rel (0) target = $region33
  $region32: #{actor_forward.1} parent=0 // pred_region
    _
  $region33: #{actor_forward.1} parent=0 // pred_fallthru
    _
  // Predicated region
  $region34: #{actor_forward.1} parent=0 // pred_check
    _
  $region35: #{actor_forward.1} parent=0 // pred_check_branch
    %331 = sbr.rel (0) target = $region37
  $region36: #{actor_forward.1} parent=0 // pred_region
    _
  $region37: #{actor_forward.1} parent=0 // pred_fallthru
    _

</llo_original>
